<compile_context>
chip_gen: v5e
topology: v5e:2x2
jax: 0.10.0
libtpu: 0.0.40
codegen_flags: <defaults>
</compile_context>

<pallas_src>
import functools

import jax
import jax.numpy as jnp
from jax import lax
from jax.experimental import pallas as pl
from jax.experimental.pallas import tpu as pltpu


# ----------------------------------------------------------------------------
# Kernel
# ----------------------------------------------------------------------------
def _swiglu_kernel(x_ref, w1_ref, w3_ref, w2_ref, o_ref, acc_ref):
    """Grid = (row tiles i, d_ff tiles k).  acc_ref: (tm, d_model) f32."""
    k = pl.program_id(1)

    @pl.when(k == 0)
    def _():
        acc_ref[...] = jnp.zeros_like(acc_ref)

    x = x_ref[...]                                            # (tm, d_model)
    # "NT" contraction: both operands contract their last dim (x @ W.T).
    nt = (((1,), (1,)), ((), ()))
    a = lax.dot_general(x, w1_ref[...], nt,
                        preferred_element_type=jnp.float32)   # (tm, tf)
    b = lax.dot_general(x, w3_ref[...], nt,
                        preferred_element_type=jnp.float32)   # (tm, tf)
    # SiLU(a) * b  (sigmoid runs on the EUP -- a separate bundle slot).
    h = (a * jax.nn.sigmoid(a)) * b                           # (tm, tf), f32
    # acc += h @ w2_tile.T (contract this d_ff tile) -> (tm, d_model)
    acc_ref[...] += lax.dot_general(h.astype(w2_ref.dtype), w2_ref[...], nt,
                                    preferred_element_type=jnp.float32)

    @pl.when(k == pl.num_programs(1) - 1)
    def _():
        o_ref[...] = acc_ref[...].astype(o_ref.dtype)


# ----------------------------------------------------------------------------
# Tiling helpers
# ----------------------------------------------------------------------------
def _round_up(x, m):
    return (x + m - 1) // m * m


def _round_down(x, m):
    return (x // m) * m


def _pick_tile_ff(d_ff, target):
    """Largest 128-multiple divisor of d_ff that is <= target, else d_ff."""
    if d_ff <= target:
        return d_ff
    t = _round_down(min(target, d_ff), 128)
    while t >= 128:
        if d_ff % t == 0:
            return t
        t -= 128
    return d_ff  # no lane-aligned divisor: keep d_ff whole (full-dim block)


def _hw_defaults():
    """Generation-aware tile / VMEM-limit defaults (trace-time host query)."""
    kind = ""
    try:
        kind = jax.devices()[0].device_kind.lower()
    except Exception:
        pass
    vmem_phys = None
    try:
        vmem_phys = int(pltpu.get_tpu_info().vmem_capacity_bytes)
    except Exception:
        pass

    is_v7 = ("v7" in kind) or ("tpu7" in kind) or (
        vmem_phys is not None and vmem_phys <= 64 * 1024 * 1024)
    is_v6 = "v6" in kind

    if is_v7:
        # 64 MiB physical VMEM per TC: cap well below it; big row tile to get
        # above the ~620 FLOP/byte ridge; smaller tf; feed both TensorCores.
        return dict(block_m=1024, tile_ff=256,
                    vmem_limit=48 * 1024 * 1024, min_row_tiles=2)
    if is_v6:
        # 128 MiB physical VMEM; ridge ~650 FLOP/byte -> big row tile.
        return dict(block_m=1024, tile_ff=512,
                    vmem_limit=100 * 1024 * 1024, min_row_tiles=1)
    # v5e / unknown: ridge ~240 FLOP/byte -> moderate tiles already fine.
    return dict(block_m=512, tile_ff=512,
                vmem_limit=96 * 1024 * 1024, min_row_tiles=1)


def _vmem_estimate(tm, tf, d_model, x_bytes, w_bytes, out_bytes):
    """Approximate VMEM footprint: double-buffered operands + scratch."""
    return (2 * tm * d_model * x_bytes            # x tile (double-buffered)
            + 2 * 2 * tf * d_model * w_bytes      # w1 + w3 tiles
            + 2 * d_model * tf * w_bytes          # w2 tile
            + 2 * tm * d_model * out_bytes        # output tile
            + tm * d_model * 4                    # f32 accumulator scratch
            + 3 * tm * tf * 4)                    # a, b, h f32 intermediates


# ----------------------------------------------------------------------------
# Wrapper
# ----------------------------------------------------------------------------
@functools.partial(jax.jit, static_argnames=("block_m", "tile_ff"))
def swiglu_pallas(x, w1, w2, w3, *, block_m=None, tile_ff=None):
    """x: [..., d_model]; w1, w3: (d_ff, d_model); w2: (d_model, d_ff)."""
    d_ff, d_model = w1.shape
    orig_shape = x.shape
    xm = x.reshape(-1, d_model)           # flatten leading dims -> (M, d_model)
    M = xm.shape[0]

    hw = _hw_defaults()
    if block_m is None:
        block_m = hw["block_m"]
    if tile_ff is None:
        tile_ff = hw["tile_ff"]
    vmem_limit = int(hw["vmem_limit"])
    min_row_tiles = hw["min_row_tiles"]

    # Row tile: clamp to the sublane granule (8 for f32, 16 for sub-32-bit).
    granule = 8 if xm.dtype.itemsize >= 4 else 16
    tm = max(granule, _round_down(min(block_m, _round_up(M, granule)), granule))
    # On v7x the "parallel" row axis is sharded across the two TensorCores:
    # guarantee >= min_row_tiles row tiles whenever M permits.
    if min_row_tiles > 1 and M >= min_row_tiles * granule:
        tm = min(tm, _round_up(-(-M // min_row_tiles), granule))

    tf = _pick_tile_ff(d_ff, tile_ff)

    # Shrink tf, then tm, until the double-buffered footprint leaves headroom
    # for Mosaic's internal scratch inside the VMEM limit.
    x_bytes = xm.dtype.itemsize
    w_bytes = w1.dtype.itemsize
    out_bytes = x.dtype.itemsize
    budget = int(0.70 * vmem_limit)
    while (_vmem_estimate(tm, tf, d_model, x_bytes, w_bytes, out_bytes) > budget
           and tf > 128):
        new_tf = _pick_tile_ff(d_ff, tf // 2)
        if new_tf >= tf:
            break
        tf = new_tf
    while (_vmem_estimate(tm, tf, d_model, x_bytes, w_bytes, out_bytes) > budget
           and tm > granule):
        tm = max(granule, _round_down(tm // 2, granule))

    M_pad = _round_up(M, tm)
    if M_pad != M:
        xm = jnp.pad(xm, ((0, M_pad - M), (0, 0)))
    n_row_tiles = M_pad // tm

    # Advisory cost: weights are re-streamed once per row tile.
    bytes_accessed = (M_pad * d_model * x_bytes                              # x
                      + n_row_tiles * (2 * d_ff * d_model * w1.dtype.itemsize
                                       + d_model * d_ff * w2.dtype.itemsize)  # w1,w3,w2
                      + M_pad * d_model * out_bytes)                          # out
    cost = pl.CostEstimate(flops=6 * M_pad * d_model * d_ff,
                           transcendentals=M_pad * d_ff,
                           bytes_accessed=bytes_accessed)

    out = pl.pallas_call(
        _swiglu_kernel,
        out_shape=jax.ShapeDtypeStruct((M_pad, d_model), x.dtype),
        grid_spec=pltpu.PrefetchScalarGridSpec(
            num_scalar_prefetch=0,
            grid=(n_row_tiles, d_ff // tf),
            in_specs=[
                pl.BlockSpec((tm, d_model), lambda i, k: (i, 0)),   # x row tile
                pl.BlockSpec((tf, d_model), lambda i, k: (k, 0)),   # w1 d_ff tile
                pl.BlockSpec((tf, d_model), lambda i, k: (k, 0)),   # w3 d_ff tile
                pl.BlockSpec((d_model, tf), lambda i, k: (0, k)),   # w2 d_ff tile
            ],
            out_specs=pl.BlockSpec((tm, d_model), lambda i, k: (i, 0)),
            scratch_shapes=[pltpu.VMEM((tm, d_model), jnp.float32)],
        ),
        compiler_params=pltpu.CompilerParams(
            dimension_semantics=("parallel", "arbitrary"),
            vmem_limit_bytes=vmem_limit,
        ),
        cost_estimate=cost,
    )(xm, w1, w3, w2)

    if M_pad != M:
        out = out[:M]
    return out.reshape(orig_shape)


def swiglu_ref(x, w1, w2, w3):
    """Pure-JAX reference matching the PyTorch forward exactly."""
    a = x @ w1.T
    silu = a * jax.nn.sigmoid(a)
    return (silu * (x @ w3.T)) @ w2.T


if __name__ == "__main__":
    key = jax.random.PRNGKey(0)

    # --- Test 1: small deterministic problem (single grid step) -------------
    batch, seq, d_model, d_ff = 2, 8, 32, 64
    kx, k1, k2, k3, key = jax.random.split(key, 5)
    x = jax.random.normal(kx, (batch, seq, d_model), dtype=jnp.float32)
    w1 = jax.random.normal(k1, (d_ff, d_model), dtype=jnp.float32) * 0.05
    w2 = jax.random.normal(k2, (d_model, d_ff), dtype=jnp.float32) * 0.05
    w3 = jax.random.normal(k3, (d_ff, d_model), dtype=jnp.float32) * 0.05

    out = jax.block_until_ready(swiglu_pallas(x, w1, w2, w3))
    ref = swiglu_ref(x, w1, w2, w3)
    assert out.shape == ref.shape == (batch, seq, d_model)
    assert jnp.allclose(out, ref, atol=1e-5, rtol=1e-5), "mismatch vs reference (small)"

    # --- Test 2: multi-tile grid (ragged M padding + d_ff accumulation) -----
    batch2, seq2, d_model2, d_ff2 = 3, 40, 64, 256   # M=120 -> padded rows
    kx, k1, k2, k3, key = jax.random.split(key, 5)
    x2 = jax.random.normal(kx, (batch2, seq2, d_model2), dtype=jnp.float32)
    w1b = jax.random.normal(k1, (d_ff2, d_model2), dtype=jnp.float32) * 0.05
    w2b = jax.random.normal(k2, (d_model2, d_ff2), dtype=jnp.float32) * 0.05
    w3b = jax.random.normal(k3, (d_ff2, d_model2), dtype=jnp.float32) * 0.05

    out2 = jax.block_until_ready(
        swiglu_pallas(x2, w1b, w2b, w3b, block_m=32, tile_ff=128))
    ref2 = swiglu_ref(x2, w1b, w2b, w3b)
    assert out2.shape == ref2.shape == (batch2, seq2, d_model2)
    assert jnp.allclose(out2, ref2, atol=2e-3, rtol=2e-3), "mismatch vs reference (tiled)"

    print("KERNEL_OK")
</pallas_src>

<mosaic_0001>
module attributes {stable_mosaic.version = 11 : i64} {
  func.func @_swiglu_kernel(%arg0: i32, %arg1: i32, %arg2: memref<16x32xf32, #tpu.memory_space<vmem>>, %arg3: memref<64x32xf32, #tpu.memory_space<vmem>>, %arg4: memref<64x32xf32, #tpu.memory_space<vmem>>, %arg5: memref<32x64xf32, #tpu.memory_space<vmem>>, %arg6: memref<16x32xf32, #tpu.memory_space<vmem>>, %arg7: memref<16x32xf32, #tpu.memory_space<vmem>>) attributes {dimension_semantics = [#tpu.dimension_semantics<parallel>, #tpu.dimension_semantics<arbitrary>], iteration_bounds = array<i64: 1, 1>, scalar_prefetch = 0 : i64, scratch_operands = 1 : i64, tpu.core_type = #tpu.core_type<tc>, window_params = [{transform_indices = @transform_0, window_bounds = array<i64: 16, 32>}, {transform_indices = @transform_1, window_bounds = array<i64: 64, 32>}, {transform_indices = @transform_2, window_bounds = array<i64: 64, 32>}, {transform_indices = @transform_3, window_bounds = array<i64: 32, 64>}, {transform_indices = @transform_4, window_bounds = array<i64: 16, 32>}]} {
    %c0_i32 = arith.constant 0 : i32
    %0 = arith.cmpi eq, %arg1, %c0_i32 : i32
    %1 = arith.extui %0 : i1 to i32
    %c0_i32_0 = arith.constant 0 : i32
    %2 = arith.cmpi ne, %1, %c0_i32_0 : i32
    scf.if %2 {
      %cst_17 = arith.constant 0.000000e+00 : f32
      %23 = vector.broadcast %cst_17 : f32 to vector<16x32xf32>
      %c0_18 = arith.constant 0 : index
      %c0_19 = arith.constant 0 : index
      %24 = vector.load %arg7[%c0_18, %c0_19] : memref<16x32xf32, #tpu.memory_space<vmem>>, vector<16x32xf32>
      tpu.vector_store %arg7[%c0_18, %c0_19], %23 {strides = array<i32>} : memref<16x32xf32, #tpu.memory_space<vmem>>, vector<16x32xf32>,
    } else {
    }
    %c0 = arith.constant 0 : index
    %c0_1 = arith.constant 0 : index
    %3 = vector.load %arg2[%c0, %c0_1] : memref<16x32xf32, #tpu.memory_space<vmem>>, vector<16x32xf32>
    %c0_2 = arith.constant 0 : index
    %c0_3 = arith.constant 0 : index
    %4 = vector.load %arg3[%c0_2, %c0_3] : memref<64x32xf32, #tpu.memory_space<vmem>>, vector<64x32xf32>
    %cst = arith.constant dense<0.000000e+00> : vector<16x64xf32>
    %5 = tpu.matmul %3, %4, %cst {dimension_numbers = #tpu.dot_dimension_numbers<[1], [1], [0], [0], [0, 0, 1, 0], [], []>} : vector<16x32xf32>, vector<64x32xf32>, vector<16x64xf32> -> vector<16x64xf32>
    %c0_4 = arith.constant 0 : index
    %c0_5 = arith.constant 0 : index
    %6 = vector.load %arg4[%c0_4, %c0_5] : memref<64x32xf32, #tpu.memory_space<vmem>>, vector<64x32xf32>
    %cst_6 = arith.constant dense<0.000000e+00> : vector<16x64xf32>
    %7 = tpu.matmul %3, %6, %cst_6 {dimension_numbers = #tpu.dot_dimension_numbers<[1], [1], [0], [0], [0, 0, 1, 0], [], []>} : vector<16x32xf32>, vector<64x32xf32>, vector<16x64xf32> -> vector<16x64xf32>
    %8 = arith.negf %5 : vector<16x64xf32>
    %9 = math.exp %8 : vector<16x64xf32>
    %cst_7 = arith.constant 1.000000e+00 : f32
    %10 = vector.broadcast %cst_7 : f32 to vector<16x64xf32>
    %11 = arith.addf %10, %9 : vector<16x64xf32>
    %12 = arith.divf %10, %11 : vector<16x64xf32>
    %13 = arith.mulf %5, %12 : vector<16x64xf32>
    %14 = arith.mulf %13, %7 : vector<16x64xf32>
    %c0_8 = arith.constant 0 : index
    %c0_9 = arith.constant 0 : index
    %15 = vector.load %arg7[%c0_8, %c0_9] : memref<16x32xf32, #tpu.memory_space<vmem>>, vector<16x32xf32>
    %c0_10 = arith.constant 0 : index
    %c0_11 = arith.constant 0 : index
    %16 = vector.load %arg5[%c0_10, %c0_11] : memref<32x64xf32, #tpu.memory_space<vmem>>, vector<32x64xf32>
    %cst_12 = arith.constant dense<0.000000e+00> : vector<16x32xf32>
    %17 = tpu.matmul %14, %16, %cst_12 {dimension_numbers = #tpu.dot_dimension_numbers<[1], [1], [0], [0], [0, 0, 1, 0], [], []>} : vector<16x64xf32>, vector<32x64xf32>, vector<16x32xf32> -> vector<16x32xf32>
    %18 = arith.addf %15, %17 : vector<16x32xf32>
    %c0_13 = arith.constant 0 : index
    %c0_14 = arith.constant 0 : index
    %19 = vector.load %arg7[%c0_13, %c0_14] : memref<16x32xf32, #tpu.memory_space<vmem>>, vector<16x32xf32>
    tpu.vector_store %arg7[%c0_13, %c0_14], %18 {strides = array<i32>} : memref<16x32xf32, #tpu.memory_space<vmem>>, vector<16x32xf32>,
    %c0_i32_15 = arith.constant 0 : i32
    %20 = arith.cmpi eq, %arg1, %c0_i32_15 : i32
    %21 = arith.extui %20 : i1 to i32
    %c0_i32_16 = arith.constant 0 : i32
    %22 = arith.cmpi ne, %21, %c0_i32_16 : i32
    scf.if %22 {
      %c0_17 = arith.constant 0 : index
      %c0_18 = arith.constant 0 : index
      %23 = vector.load %arg7[%c0_17, %c0_18] : memref<16x32xf32, #tpu.memory_space<vmem>>, vector<16x32xf32>
      %c0_19 = arith.constant 0 : index
      %c0_20 = arith.constant 0 : index
      %24 = vector.load %arg6[%c0_19, %c0_20] : memref<16x32xf32, #tpu.memory_space<vmem>>, vector<16x32xf32>
      tpu.vector_store %arg6[%c0_19, %c0_20], %23 {strides = array<i32>} : memref<16x32xf32, #tpu.memory_space<vmem>>, vector<16x32xf32>,
    } else {
    }
    return
  }
  func.func @transform_0(%arg0: i32, %arg1: i32) -> (i32, i32) {
    %c0_i32 = arith.constant 0 : i32
    %c0_i32_0 = arith.constant 0 : i32
    return %arg0, %c0_i32 : i32, i32
  }
  func.func @transform_1(%arg0: i32, %arg1: i32) -> (i32, i32) {
    %c0_i32 = arith.constant 0 : i32
    %c0_i32_0 = arith.constant 0 : i32
    return %arg1, %c0_i32 : i32, i32
  }
  func.func @transform_2(%arg0: i32, %arg1: i32) -> (i32, i32) {
    %c0_i32 = arith.constant 0 : i32
    %c0_i32_0 = arith.constant 0 : i32
    return %arg1, %c0_i32 : i32, i32
  }
  func.func @transform_3(%arg0: i32, %arg1: i32) -> (i32, i32) {
    %c0_i32 = arith.constant 0 : i32
    %c0_i32_0 = arith.constant 0 : i32
    return %c0_i32, %arg1 : i32, i32
  }
  func.func @transform_4(%arg0: i32, %arg1: i32) -> (i32, i32) {
    %c0_i32 = arith.constant 0 : i32
    %c0_i32_0 = arith.constant 0 : i32
    return %arg0, %c0_i32 : i32, i32
  }
}

</mosaic_0001>

<llo_original>
// kernel: swiglu_pallas.1
$region0: #{swiglu_pallas.1}
  #allocation0 [shape = 'u32[]', space=smem, size = 0x4, offset = 0x4, fixed_abs, tag = 'smem constant byte address 0x4 - core index']
  #allocation1 [shape = 'u32[72,128]{1,0:T(1,128)}', space=vmem, size = 0x9000, scoped, tag = 'internal scratch']
  #allocation2 [shape = 'f32[16,32]{1,0:T(8,128)}', space=vmem, size = 0x2000, scoped, tag = 'scratch operand']
  %s0 = inlined_call_operand.vmem [shape: f32[16,32], index: 0, kind: input, shape index: {}]
  %s1 = inlined_call_operand.vmem [shape: f32[64,32], index: 1, kind: input, shape index: {}]
  %s2 = inlined_call_operand.vmem [shape: f32[64,32], index: 2, kind: input, shape index: {}]
  %s3 = inlined_call_operand.vmem [shape: f32[32,64], index: 3, kind: input, shape index: {}]
  %s4 = inlined_call_operand.hbm [shape: f32[16,32], index: 4, kind: output, shape index: {}]
  %s5 = sld [smem:[#allocation0]]
  $region34: #{swiglu_pallas.1} parent=0
    _
  %s7 = ssub.s32 1, %s5
  %s8 = scalar_select 0, %s7, %s5
  $region1: #{swiglu_pallas.1} parent=0
    #allocation3 [shape = 'u8[8192]{0}', space=vmem, size = 0x2000, scoped, tag = 'output window, operand 0, single buffered']
    #allocation4 [shape = 's32[1]{0}', space=sflag, size = 0x4, scoped, tag = 'scoped memory for swiglu_pallas.1']
    %9 = vsyncpa [#allocation4], 0
    // Predicated region
    $region2: #{swiglu_pallas.1} parent=1 // pred_check
      _
    $region3: #{swiglu_pallas.1} parent=1 // pred_check_branch
      %11 = sbr.rel (0) target = $region5
    $region4: #{swiglu_pallas.1} parent=1 // pred_region
      _
    $region5: #{swiglu_pallas.1} parent=1 // pred_fallthru
      _
    // Predicated region
    $region6: #{swiglu_pallas.1} parent=1 // pred_check
      _
    $region7: #{swiglu_pallas.1} parent=1 // pred_check_branch
      %13 = sbr.rel (0) target = $region9
    $region8: #{swiglu_pallas.1} parent=1 // pred_region
      _
    $region9: #{swiglu_pallas.1} parent=1 // pred_fallthru
      _
    // Predicated region
    $region10: #{swiglu_pallas.1} parent=1 // pred_check
      _
    $region11: #{swiglu_pallas.1} parent=1 // pred_check_branch
      %15 = sbr.rel (0) target = $region13
    $region12: #{swiglu_pallas.1} parent=1 // pred_region
      _
    $region13: #{swiglu_pallas.1} parent=1 // pred_fallthru
      _
    // Predicated region
    $region14: #{swiglu_pallas.1} parent=1 // pred_check
      _
    $region15: #{swiglu_pallas.1} parent=1 // pred_check_branch
      %17 = sbr.rel (0) target = $region17
    $region16: #{swiglu_pallas.1} parent=1 // pred_region
      _
    $region17: #{swiglu_pallas.1} parent=1 // pred_fallthru
      _
    %p18 = scmp.eq.s32.totalorder 0, 0
    // Predicated region
    $region18: #{swiglu_pallas.1} parent=1 // pred_check
      %p19 = pneg %p18
    $region19: #{swiglu_pallas.1} parent=1 // pred_check_branch
      %21 = sbr.rel (%p19) target = $region21
    $region20: #{swiglu_pallas.1} parent=1 // pred_region
      %vm22 = vcmask 261120
      %23 = vst.msk [vmem:[#allocation2] sm:$0xff] %vm22, 0.0
      %24 = vst.msk [vmem:[#allocation2 + $0x8] sm:$0xff] %vm22, 0.0
    $region21: #{swiglu_pallas.1} parent=1 // pred_fallthru
      _
    %v25 = vld [vmem:[%s0] sm:$0xff]
    %v26 = vld [vmem:[%s0 + $0x8] sm:$0xff]
    %v27 = vld [vmem:[%s1] sm:$0xff]
    %v28 = vld [vmem:[%s1 + $0x8] sm:$0xff]
    %v29 = vld [vmem:[%s1 + $0x10] sm:$0xff]
    %v30 = vld [vmem:[%s1 + $0x18] sm:$0xff]
    %v31 = vld [vmem:[%s1 + $0x20] sm:$0xff]
    %v32 = vld [vmem:[%s1 + $0x28] sm:$0xff]
    %v33 = vld [vmem:[%s1 + $0x30] sm:$0xff]
    %v34 = vld [vmem:[%s1 + $0x38] sm:$0xff]
    %vm35 = vcmask 261120
    %v37 = vsel %vm35, %v25, 0
    %v40 = vsel %vm35, %v26, 0
    %v43 = vsel %vm35, %v27, 0
    %v46 = vsel %vm35, %v28, 0
    %v49 = vsel %vm35, %v29, 0
    %v52 = vsel %vm35, %v30, 0
    %v55 = vsel %vm35, %v31, 0
    %v58 = vsel %vm35, %v32, 0
    %v61 = vsel %vm35, %v33, 0
    %v64 = vsel %vm35, %v34, 0
    %66 = vmatpush.xpose.msra.mxu0 0.0
    %67 = vmatpush.xpose.msra.mxu0 0.0
    %68 = vmatpush.xpose.msra.mxu0 0.0
    %69 = vmatpush.xpose.msra.mxu0 0.0
    %70 = vmatpush.xpose.msra.mxu0 0.0
    %71 = vmatpush.xpose.msra.mxu0 0.0
    %72 = vmatpush.xpose.msra.mxu0 0.0
    %73 = vmatpush.xpose.msra.mxu0 0.0
    %74 = vmatpush.xpose.msra.mxu0 %v64
    %75 = vmatpush.xpose.msra.mxu0 %v61
    %76 = vmatpush.xpose.msra.mxu0 %v58
    %77 = vmatpush.xpose.msra.mxu0 %v55
    %78 = vmatpush.xpose.msra.mxu0 %v52
    %79 = vmatpush.xpose.msra.mxu0 %v49
    %80 = vmatpush.xpose.msra.mxu0 %v46
    %81 = vmatpush.xpose.msra.mxu0 %v43
    %82 = vmatmul.f32.gmra.mxu0 %v37
    %v83 = vpop.f32.mrf.mxu0
    %v84 = vadd.f32 0.0, %v83
    %85 = vmatmul.f32.gmra.mxu0 %v40
    %v86 = vpop.f32.mrf.mxu0
    %v87 = vadd.f32 0.0, %v86
    %88 = vdwg.mxu0
    %v89 = vld [vmem:[%s2] sm:$0xff]
    %v90 = vld [vmem:[%s2 + $0x8] sm:$0xff]
    %v91 = vld [vmem:[%s2 + $0x10] sm:$0xff]
    %v92 = vld [vmem:[%s2 + $0x18] sm:$0xff]
    %v93 = vld [vmem:[%s2 + $0x20] sm:$0xff]
    %v94 = vld [vmem:[%s2 + $0x28] sm:$0xff]
    %v95 = vld [vmem:[%s2 + $0x30] sm:$0xff]
    %v96 = vld [vmem:[%s2 + $0x38] sm:$0xff]
    %v98 = vsel %vm35, %v89, 0
    %v101 = vsel %vm35, %v90, 0
    %v104 = vsel %vm35, %v91, 0
    %v107 = vsel %vm35, %v92, 0
    %v110 = vsel %vm35, %v93, 0
    %v113 = vsel %vm35, %v94, 0
    %v116 = vsel %vm35, %v95, 0
    %v119 = vsel %vm35, %v96, 0
    %121 = vmatpush.xpose.msra.mxu0 0.0
    %122 = vmatpush.xpose.msra.mxu0 0.0
    %123 = vmatpush.xpose.msra.mxu0 0.0
    %124 = vmatpush.xpose.msra.mxu0 0.0
    %125 = vmatpush.xpose.msra.mxu0 0.0
    %126 = vmatpush.xpose.msra.mxu0 0.0
    %127 = vmatpush.xpose.msra.mxu0 0.0
    %128 = vmatpush.xpose.msra.mxu0 0.0
    %129 = vmatpush.xpose.msra.mxu0 %v119
    %130 = vmatpush.xpose.msra.mxu0 %v116
    %131 = vmatpush.xpose.msra.mxu0 %v113
    %132 = vmatpush.xpose.msra.mxu0 %v110
    %133 = vmatpush.xpose.msra.mxu0 %v107
    %134 = vmatpush.xpose.msra.mxu0 %v104
    %135 = vmatpush.xpose.msra.mxu0 %v101
    %136 = vmatpush.xpose.msra.mxu0 %v98
    %137 = vmatmul.f32.gmra.mxu0 %v37
    %v138 = vpop.f32.mrf.mxu0
    %v139 = vadd.f32 0.0, %v138
    %140 = vmatmul.f32.gmra.mxu0 %v40
    %v141 = vpop.f32.mrf.mxu0
    %v142 = vadd.f32 0.0, %v141
    %143 = vdwg.mxu0
    %v144 = vxor.u32 %v84, 2147483648
    %v145 = vxor.u32 %v87, 2147483648
    %v146 = vmul.f32 %v144, 1.442695
    %v147 = vpow.pop %v146
    %v148 = vmul.f32 %v145, 1.442695
    %v149 = vpow.pop %v148
    %v150 = vadd.f32 %v147, 1.0
    %v151 = vadd.f32 %v149, 1.0
    %v152 = vrcp.pop %v150
    %v153 = vmul.f32 %v150, %v152
    %v154 = vsub.f32 1.0, %v153
    %v155 = vmul.f32 %v152, %v154
    %v156 = vadd.f32 %v152, %v155
    %vm157 = vweird.f32 %v150
    %vm158 = vweird.f32 %v152
    %vm159 = vmor %vm157, %vm158
    %v160 = vsel %vm159, %v152, %v156
    %v161 = vand.u32 2147483647, %v150
    %vm162 = vcmp.eq.f32.partialorder %v161, 8.507059e+37
    %v163 = vand.u32 %v150, 2147483648
    %v164 = vor.u32 1.1754944e-38, %v163
    %v165 = vsel %vm162, %v164, %v160
    %v166 = vmul.f32 1.0, %v165
    %v167 = vrcp.pop %v151
    %v168 = vmul.f32 %v151, %v167
    %v169 = vsub.f32 1.0, %v168
    %v170 = vmul.f32 %v167, %v169
    %v171 = vadd.f32 %v167, %v170
    %vm172 = vweird.f32 %v151
    %vm173 = vweird.f32 %v167
    %vm174 = vmor %vm172, %vm173
    %v175 = vsel %vm174, %v167, %v171
    %v176 = vand.u32 2147483647, %v151
    %vm177 = vcmp.eq.f32.partialorder %v176, 8.507059e+37
    %v178 = vand.u32 %v151, 2147483648
    %v179 = vor.u32 1.1754944e-38, %v178
    %v180 = vsel %vm177, %v179, %v175
    %v181 = vmul.f32 1.0, %v180
    %v182 = vmul.f32 %v84, %v166
    %v183 = vmul.f32 %v87, %v181
    %v184 = vmul.f32 %v182, %v139
    %v185 = vmul.f32 %v183, %v142
    %v186 = vld [vmem:[#allocation2] sm:$0xff]
    %v187 = vld [vmem:[#allocation2 + $0x8] sm:$0xff]
    %v188 = vld [vmem:[%s3] sm:$0xff]
    %v189 = vld [vmem:[%s3 + $0x8] sm:$0xff]
    %v190 = vld [vmem:[%s3 + $0x10] sm:$0xff]
    %v191 = vld [vmem:[%s3 + $0x18] sm:$0xff]
    %vm192 = vcmask 523264
    %v194 = vsel %vm192, %v184, 0
    %v197 = vsel %vm192, %v185, 0
    %v200 = vsel %vm192, %v188, 0
    %v203 = vsel %vm192, %v189, 0
    %v206 = vsel %vm192, %v190, 0
    %v209 = vsel %vm192, %v191, 0
    %211 = vmatpush.xpose.msra.mxu0 0.0
    %212 = vmatpush.xpose.msra.mxu0 0.0
    %213 = vmatpush.xpose.msra.mxu0 0.0
    %214 = vmatpush.xpose.msra.mxu0 0.0
    %215 = vmatpush.xpose.msra.mxu0 0.0
    %216 = vmatpush.xpose.msra.mxu0 0.0
    %217 = vmatpush.xpose.msra.mxu0 0.0
    %218 = vmatpush.xpose.msra.mxu0 0.0
    %219 = vmatpush.xpose.msra.mxu0 0.0
    %220 = vmatpush.xpose.msra.mxu0 0.0
    %221 = vmatpush.xpose.msra.mxu0 0.0
    %222 = vmatpush.xpose.msra.mxu0 0.0
    %223 = vmatpush.xpose.msra.mxu0 %v209
    %224 = vmatpush.xpose.msra.mxu0 %v206
    %225 = vmatpush.xpose.msra.mxu0 %v203
    %226 = vmatpush.xpose.msra.mxu0 %v200
    %227 = vmatmul.f32.gmra.mxu0 %v194
    %v228 = vpop.f32.mrf.mxu0
    %v229 = vadd.f32 0.0, %v228
    %230 = vmatmul.f32.gmra.mxu0 %v197
    %v231 = vpop.f32.mrf.mxu0
    %v232 = vadd.f32 0.0, %v231
    %233 = vdwg.mxu0
    %v234 = vadd.f32 %v186, %v229
    %v235 = vadd.f32 %v187, %v232
    %236 = vst.msk [vmem:[#allocation2] sm:$0xff] %vm35, %v234
    %237 = vst.msk [vmem:[#allocation2 + $0x8] sm:$0xff] %vm35, %v235
    // Predicated region
    $region22: #{swiglu_pallas.1} parent=1 // pred_check
      %p238 = pneg %p18
    $region23: #{swiglu_pallas.1} parent=1 // pred_check_branch
      %240 = sbr.rel (%p238) target = $region25
    $region24: #{swiglu_pallas.1} parent=1 // pred_region
      %v241 = vld [vmem:[#allocation2] sm:$0xff]
      %v242 = vld [vmem:[#allocation2 + $0x8] sm:$0xff]
      %243 = vst.msk [vmem:[#allocation3] sm:$0xff] %vm35, %v241
      %244 = vst.msk [vmem:[#allocation3 + $0x8] sm:$0xff] %vm35, %v242
    $region25: #{swiglu_pallas.1} parent=1 // pred_fallthru
      _
    // Predicated region
    $region26: #{swiglu_pallas.1} parent=1 // pred_check
      _
    $region27: #{swiglu_pallas.1} parent=1 // pred_check_branch
      %246 = sbr.rel (0) target = $region29
    $region28: #{swiglu_pallas.1} parent=1 // pred_region
      %248 = vsyncadd [#allocation4], 0
      %s249 = sshll.u32 [#allocation3], 4
      %s250 = int_to_ptr.vmem [resolvable:$true] %s249
      %s251 = sshll.u32 %s4, 4
      %s252 = int_to_ptr.hbm [resolvable:$true] %s251
      %257 = dma.vmem_to_hbm [thread:$0]  %s250, 256, %s252, [#allocation4], 128, 128, 8
    $region29: #{swiglu_pallas.1} parent=1 // pred_fallthru
      _
    // Predicated region
    $region30: #{swiglu_pallas.1} parent=1 // pred_check
      _
    $region31: #{swiglu_pallas.1} parent=1 // pred_check_branch
      %259 = sbr.rel (0) target = $region33
    $region32: #{swiglu_pallas.1} parent=1 // pred_region
      %261 = dma.done [#allocation4], 256
    $region33: #{swiglu_pallas.1} parent=1 // pred_fallthru
      _
    %262 = vsyncpa [#allocation4], 1

</llo_original>
